<compile_context>
chip_gen: v7x
topology: tpu7x:2x2x1
jax: 0.10.0
libtpu: 0.0.40
codegen_flags: <defaults>
</compile_context>

<pallas_src>
import functools
import math

import jax
import jax.numpy as jnp
from jax.experimental import pallas as pl
from jax.experimental.pallas import tpu as pltpu


def _wing_loss_kernel(pred_ref, tgt_ref, out_ref, *, omega, epsilon, c_const,
                      n_rows, block_rows):
    p = pred_ref[...].astype(jnp.float32)                      # (TB, N)
    t = tgt_ref[...].astype(jnp.float32)

    # Per-column eye weighting: point indices 36..47 get weight 10.
    col = jax.lax.broadcasted_iota(jnp.int32, p.shape, 1)
    w = jnp.where((col >= 36) & (col < 48), 10.0, 1.0)

    d = jnp.abs(t - p) * w
    small = omega * jnp.log(1.0 + d * (1.0 / epsilon))          # EUP log
    loss = jnp.where(d < omega, small, d - c_const)

    # Mask rows past the true end of the (B*3, N) input (ragged last block).
    row0 = pl.program_id(0) * block_rows
    row = row0 + jax.lax.broadcasted_iota(jnp.int32, p.shape, 0)
    loss = jnp.where(row < n_rows, loss, 0.0)

    partial = jnp.sum(loss, axis=1, keepdims=True)              # (TB, 1) lane reduce
    partial = jnp.sum(partial, axis=0, keepdims=True)           # (1, 1)  sublane reduce
    out_ref[...] = partial.reshape(1, 1, 1)


@functools.partial(jax.jit, static_argnames=("omega", "epsilon", "block_rows"))
def wing_loss(pred, target, omega=10.0, epsilon=2.0, block_rows=1024):
    assert pred.ndim == 3 and pred.shape == target.shape
    B, C3, N = pred.shape
    rows = B * C3
    p2 = pred.reshape(rows, N)      # free metadata reshape (contiguous)
    t2 = target.reshape(rows, N)

    assert block_rows % 8 == 0
    # Small inputs: one block equal to the full row extent (always a legal
    # block shape). Large inputs: fixed multiple-of-8 tile + ragged mask.
    tb = block_rows if rows > block_rows else rows
    num_blocks = pl.cdiv(rows, tb)

    c_const = omega - omega * math.log(1.0 + omega / epsilon)

    kernel = functools.partial(
        _wing_loss_kernel,
        omega=float(omega), epsilon=float(epsilon), c_const=float(c_const),
        n_rows=rows, block_rows=tb)

    partials = pl.pallas_call(
        kernel,
        out_shape=jax.ShapeDtypeStruct((num_blocks, 1, 1), jnp.float32),
        grid_spec=pltpu.PrefetchScalarGridSpec(
            num_scalar_prefetch=0,
            grid=(num_blocks,),
            in_specs=[
                pl.BlockSpec((tb, N), lambda i: (i, 0)),
                pl.BlockSpec((tb, N), lambda i: (i, 0)),
            ],
            out_specs=pl.BlockSpec((1, 1, 1), lambda i: (i, 0, 0)),
        ),
        compiler_params=pltpu.CompilerParams(
            dimension_semantics=("parallel",)),
    )(p2, t2)

    total = jnp.sum(partials)
    return total / jnp.float32(rows * N)


def _ref_wing_loss(pred, target, omega=10.0, epsilon=2.0):
    pred = pred.astype(jnp.float32)
    target = target.astype(jnp.float32)
    w = jnp.ones_like(pred).at[:, :, 36:48].multiply(10.0)
    d = jnp.abs(target - pred) * w
    c = omega - omega * math.log(1.0 + omega / epsilon)
    loss = jnp.where(d < omega, omega * jnp.log(1.0 + d / epsilon), d - c)
    return jnp.mean(loss)


if __name__ == "__main__":
    key = jax.random.PRNGKey(0)
    k1, k2, k3, k4 = jax.random.split(key, 4)

    # Small shape consistent with the module: 68 facial landmarks x 3 coords.
    B, C3, N = 2, 3, 68
    pred = jax.random.normal(k1, (B, C3, N), dtype=jnp.float32)
    tgt = jax.random.normal(k2, (B, C3, N), dtype=jnp.float32)

    out = jax.block_until_ready(wing_loss(pred, tgt))
    ref = _ref_wing_loss(pred, tgt)
    assert out.shape == ()
    assert jnp.allclose(out, ref, atol=1e-5, rtol=1e-5), (out, ref)

    # Multi-block + ragged-last-block path (rows = 36, block_rows = 16 -> 3 blocks).
    B2 = 12
    pred2 = jax.random.normal(k3, (B2, C3, N), dtype=jnp.float32) * 2.0
    tgt2 = jax.random.normal(k4, (B2, C3, N), dtype=jnp.float32)
    out2 = jax.block_until_ready(wing_loss(pred2, tgt2, block_rows=16))
    ref2 = _ref_wing_loss(pred2, tgt2)
    assert jnp.allclose(out2, ref2, atol=1e-5, rtol=1e-5), (out2, ref2)

    print("KERNEL_OK")
</pallas_src>

<mosaic_0001>
module attributes {stable_mosaic.version = 11 : i64} {
  func.func @_wing_loss_kernel(%arg0: i32, %arg1: memref<6x68xf32, #tpu.memory_space<vmem>>, %arg2: memref<6x68xf32, #tpu.memory_space<vmem>>, %arg3: memref<1x1x1xf32, #tpu.memory_space<vmem>>) attributes {dimension_semantics = [#tpu.dimension_semantics<parallel>], iteration_bounds = array<i64: 1>, scalar_prefetch = 0 : i64, scratch_operands = 0 : i64, tpu.core_type = #tpu.core_type<tc>, window_params = [{transform_indices = @transform_0, window_bounds = array<i64: 6, 68>}, {transform_indices = @transform_1, window_bounds = array<i64: 6, 68>}, {transform_indices = @transform_2, window_bounds = array<i64: 1, 1, 1>}]} {
    %c0 = arith.constant 0 : index
    %c0_0 = arith.constant 0 : index
    %0 = vector.load %arg1[%c0, %c0_0] : memref<6x68xf32, #tpu.memory_space<vmem>>, vector<6x68xf32>
    %c0_1 = arith.constant 0 : index
    %c0_2 = arith.constant 0 : index
    %1 = vector.load %arg2[%c0_1, %c0_2] : memref<6x68xf32, #tpu.memory_space<vmem>>, vector<6x68xf32>
    %2 = tpu.iota {dimensions = array<i32: 1>} : vector<6x68xi32>
    %c36_i32 = arith.constant 36 : i32
    %3 = vector.broadcast %c36_i32 : i32 to vector<6x68xi32>
    %4 = arith.cmpi sge, %2, %3 : vector<6x68xi32>
    %c48_i32 = arith.constant 48 : i32
    %5 = vector.broadcast %c48_i32 : i32 to vector<6x68xi32>
    %6 = arith.cmpi slt, %2, %5 : vector<6x68xi32>
    %7 = arith.andi %4, %6 : vector<6x68xi1>
    %cst = arith.constant 1.000000e+01 : f32
    %cst_3 = arith.constant 1.000000e+00 : f32
    %8 = vector.broadcast %cst : f32 to vector<6x68xf32>
    %9 = vector.broadcast %cst_3 : f32 to vector<6x68xf32>
    %10 = arith.select %7, %8, %9 : vector<6x68xi1>, vector<6x68xf32>
    %11 = arith.subf %1, %0 : vector<6x68xf32>
    %12 = math.absf %11 : vector<6x68xf32>
    %13 = arith.mulf %12, %10 : vector<6x68xf32>
    %cst_4 = arith.constant 5.000000e-01 : f32
    %14 = vector.broadcast %cst_4 : f32 to vector<6x68xf32>
    %15 = arith.mulf %13, %14 : vector<6x68xf32>
    %cst_5 = arith.constant 1.000000e+00 : f32
    %16 = vector.broadcast %cst_5 : f32 to vector<6x68xf32>
    %17 = arith.addf %16, %15 : vector<6x68xf32>
    %18 = math.log %17 : vector<6x68xf32>
    %cst_6 = arith.constant 1.000000e+01 : f32
    %19 = vector.broadcast %cst_6 : f32 to vector<6x68xf32>
    %20 = arith.mulf %19, %18 : vector<6x68xf32>
    %cst_7 = arith.constant 1.000000e+01 : f32
    %21 = vector.broadcast %cst_7 : f32 to vector<6x68xf32>
    %22 = arith.cmpf olt, %13, %21 : vector<6x68xf32>
    %cst_8 = arith.constant -7.9175949 : f32
    %23 = vector.broadcast %cst_8 : f32 to vector<6x68xf32>
    %24 = arith.subf %13, %23 : vector<6x68xf32>
    %25 = arith.select %22, %20, %24 : vector<6x68xi1>, vector<6x68xf32>
    %c6_i32 = arith.constant 6 : i32
    %26 = arith.muli %arg0, %c6_i32 : i32
    %27 = tpu.iota {dimensions = array<i32: 0>} : vector<6x68xi32>
    %28 = vector.broadcast %26 : i32 to vector<6x68xi32>
    %29 = arith.addi %28, %27 : vector<6x68xi32>
    %c6_i32_9 = arith.constant 6 : i32
    %30 = vector.broadcast %c6_i32_9 : i32 to vector<6x68xi32>
    %31 = arith.cmpi slt, %29, %30 : vector<6x68xi32>
    %cst_10 = arith.constant 0.000000e+00 : f32
    %32 = vector.broadcast %cst_10 : f32 to vector<6x68xf32>
    %33 = arith.select %31, %25, %32 : vector<6x68xi1>, vector<6x68xf32>
    %cst_11 = arith.constant dense<0.000000e+00> : vector<6xf32>
    %34 = vector.multi_reduction <add>, %33, %cst_11 [1] : vector<6x68xf32> to vector<6xf32>
    %35 = vector.shape_cast %34 : vector<6xf32> to vector<6x1xf32>
    %cst_12 = arith.constant dense<0.000000e+00> : vector<1xf32>
    %36 = vector.multi_reduction <add>, %35, %cst_12 [0] : vector<6x1xf32> to vector<1xf32>
    %37 = vector.shape_cast %36 : vector<1xf32> to vector<1x1xf32>
    %38 = vector.shape_cast %37 : vector<1x1xf32> to vector<1x1x1xf32>
    %c0_13 = arith.constant 0 : index
    %c0_14 = arith.constant 0 : index
    %c0_15 = arith.constant 0 : index
    %39 = vector.load %arg3[%c0_13, %c0_14, %c0_15] : memref<1x1x1xf32, #tpu.memory_space<vmem>>, vector<1x1x1xf32>
    tpu.vector_store %arg3[%c0_13, %c0_14, %c0_15], %38 {strides = array<i32>} : memref<1x1x1xf32, #tpu.memory_space<vmem>>, vector<1x1x1xf32>,
    return
  }
  func.func @transform_0(%arg0: i32) -> (i32, i32) {
    %c0_i32 = arith.constant 0 : i32
    %c0_i32_0 = arith.constant 0 : i32
    return %arg0, %c0_i32 : i32, i32
  }
  func.func @transform_1(%arg0: i32) -> (i32, i32) {
    %c0_i32 = arith.constant 0 : i32
    %c0_i32_0 = arith.constant 0 : i32
    return %arg0, %c0_i32 : i32, i32
  }
  func.func @transform_2(%arg0: i32) -> (i32, i32, i32) {
    %c0_i32 = arith.constant 0 : i32
    %c0_i32_0 = arith.constant 0 : i32
    %c0_i32_1 = arith.constant 0 : i32
    return %arg0, %c0_i32, %c0_i32_0 : i32, i32, i32
  }
}

</mosaic_0001>

<llo_original>
// kernel: wing_loss.1
$region0: #{wing_loss.1}
  #allocation0 [shape = 'u32[]', space=smem, size = 0x4, offset = 0x4, fixed_abs, tag = 'smem constant byte address 0x4 - core index']
  #allocation1 [shape = 'u32[144,128]{1,0:T(1,128)}', space=vmem, size = 0x12000, scoped, tag = 'internal scratch']
  %s0 = inlined_call_operand.vmem [shape: f32[6,68], index: 0, kind: input, shape index: {}]
  %s1 = inlined_call_operand.vmem [shape: f32[6,68], index: 1, kind: input, shape index: {}]
  %s2 = inlined_call_operand.hbm [shape: f32[1,1,1], index: 2, kind: output, shape index: {}]
  %s3 = sld [smem:[#allocation0]]
  $region18: #{wing_loss.1} parent=0
    _
  %s5 = ssub.s32 1, %s3
  %s6 = scalar_select 0, %s5, %s3
  $region1: #{wing_loss.1} parent=0
    #allocation2 [shape = 'u8[512]{0}', space=vmem, size = 0x400, scoped, tag = 'output window, operand 0, single buffered']
    #allocation3 [shape = 's32[1]{0}', space=sflag, size = 0x4, scoped, tag = 'scoped memory for wing_loss.1']
    %7 = vsyncpa [#allocation3], 0
    // Predicated region
    $region2: #{wing_loss.1} parent=1 // pred_check
      _
    $region3: #{wing_loss.1} parent=1 // pred_check_branch
      %9 = sbr.rel (0) target = $region5
    $region4: #{wing_loss.1} parent=1 // pred_region
      _
    $region5: #{wing_loss.1} parent=1 // pred_fallthru
      _
    // Predicated region
    $region6: #{wing_loss.1} parent=1 // pred_check
      _
    $region7: #{wing_loss.1} parent=1 // pred_check_branch
      %11 = sbr.rel (0) target = $region9
    $region8: #{wing_loss.1} parent=1 // pred_region
      _
    $region9: #{wing_loss.1} parent=1 // pred_fallthru
      _
    %v12 = vld [vmem:[%s0] sm:$0x3f]
    %v13 = vld [vmem:[%s1] sm:$0x3f]
    %v14 = vlaneseq
    %v15 = vand.u32 %v14, 127
    %vm16 = vcmp.ge.s32.totalorder %v15, 36
    %vm17 = vcmp.lt.s32.totalorder %v15, 48
    %vm18 = vmand %vm16, %vm17
    %v19 = vsel %vm18, 10.0, 1.0
    %v20 = vsub.f32 %v13, %v12
    %v21 = vand.u32 2147483647, %v20
    %v22 = vmul.f32 %v21, %v19
    %v23 = vmul.f32 %v22, 0.5
    %v24 = vadd.f32 %v23, 1.0
    %v25 = vlog2.pop %v24
    %v26 = vmul.f32 %v25, 0.6931472
    %v27 = vmul.f32 %v26, 10.0
    %vm28 = vcmp.lt.f32.partialorder %v22, 10.0
    %v29 = vsub.f32 %v22, -7.917595
    %v30 = vsel %vm28, %v27, %v29
    %s31 = smul.u32 0, 6
    %v32 = vlaneseq
    %v33 = vshrl.u32 %v32, 7
    %v34 = vstv %s31
    %v35 = vadd.s32 %v34, %v33
    %vm36 = vcmp.lt.s32.totalorder %v35, 6
    %v37 = vsel %vm36, %v30, 0.0
    %vm38 = vcmask 553984
    %v39 = vsel %vm38, %v37, 0.0
    %40 = vadd.xlane.f32.xlu0 %v39
    %v41 = vpop.xlane.xlu0 %40
    %vm42 = vcmask 1045504
    %v43 = vsel %vm42, %v41, 0.0
    %v44 = vrot.slane %v43, 4
    %v45 = vadd.f32 %v43, %v44
    %v46 = vrot.slane %v45, 2
    %v47 = vadd.f32 %v45, %v46
    %v48 = vrot.slane %v47, 1
    %v49 = vadd.f32 %v47, %v48
    %vm50 = vcmask 0
    %51 = vst.msk [vmem:[#allocation2] sm:$0x1] %vm50, %v49
    // Predicated region
    $region10: #{wing_loss.1} parent=1 // pred_check
      _
    $region11: #{wing_loss.1} parent=1 // pred_check_branch
      %53 = sbr.rel (0) target = $region13
    $region12: #{wing_loss.1} parent=1 // pred_region
      %s55 = ssub.s32 16, 16
      %56 = vsyncadd [#allocation3], %s55
      %s58 = sshll.u32 [#allocation2], 4
      %s59 = int_to_ptr.vmem [resolvable:$true] %s58
      %61 = dma.vmem_to_hbm [thread:$0]  %s59, 16, %s2, [#allocation3]
    $region13: #{wing_loss.1} parent=1 // pred_fallthru
      _
    // Predicated region
    $region14: #{wing_loss.1} parent=1 // pred_check
      _
    $region15: #{wing_loss.1} parent=1 // pred_check_branch
      %63 = sbr.rel (0) target = $region17
    $region16: #{wing_loss.1} parent=1 // pred_region
      %64 = dma.done [#allocation3], 16
    $region17: #{wing_loss.1} parent=1 // pred_fallthru
      _
    %65 = vsyncpa [#allocation3], 1

</llo_original>
